<compile_context>
chip_gen: v6e
topology: v6e:2x2x1
jax: 0.10.0
libtpu: 0.0.40
codegen_flags: <defaults>
</compile_context>

<pallas_src>
import functools

import jax
import jax.numpy as jnp
from jax.experimental import pallas as pl
from jax.experimental.pallas import tpu as pltpu


def prepare_gat_params(weight, weight_a1, weight_a2):
    """One-time (per layer) parameter preparation.

    * fuses a1/a2 into a single (F_out, 2) attention matrix,
    * zero-pads F_out up to a multiple of 128 lanes (lane-dense MXU passes and
      unmasked output stores),
    * pre-casts to bf16 (the parameters are reused every call, so the cast and
      the halved DMA bytes are amortized across calls).
    """
    f_in, f_out = weight.shape
    f_pad = max(128, ((f_out + 127) // 128) * 128)
    pad = f_pad - f_out

    a12 = jnp.concatenate([weight_a1, weight_a2], axis=1)          # (F_out, 2)
    w_pad = jnp.pad(weight, ((0, 0), (0, pad)))                    # (F_in, F_pad)
    a12_pad = jnp.pad(a12, ((0, pad), (0, 0)))                     # (F_pad, 2)

    return {
        "w_bf16": w_pad.astype(jnp.bfloat16),
        "a12_bf16": a12_pad.astype(jnp.bfloat16),
        "f_out": f_out,
        "f_pad": f_pad,
    }


def _gat_kernel(x_ref, adj_ref, w_ref, a12_ref, out_ref, *, alpha, batch, nodes):
    # x_ref:   (B*N, F_in)   f32   node features, (batch, node) flattened
    # adj_ref: (B, N, N)     f32   original preprocessed adjacency (used as > 0)
    # w_ref:   (F_in, F_pad) bf16  pre-cast, lane-padded weight
    # a12_ref: (F_pad, 2)    bf16  fused [a1 | a2] attention vectors
    # out_ref: (B*N, F_pad)  f32   lane-dense output slab (wrapper slices F_out)
    B, N = batch, nodes
    f_pad = w_ref.shape[1]

    # ---- h = x @ W ---------------------------------------------------------
    # One tall MXU matmul for the whole batch; bf16 operands, f32 accumulation.
    # x is activation data -> cast in-kernel; W was pre-cast in the wrapper.
    h = jnp.dot(
        x_ref[...].astype(jnp.bfloat16),
        w_ref[...],
        preferred_element_type=jnp.float32,
    )  # (B*N, F_pad) f32  (padded columns are exactly zero)

    # ---- attention logits --------------------------------------------------
    # Fused a1/a2: a single (B*N, F_pad) @ (F_pad, 2) MXU pass.
    f12 = jnp.dot(
        h.astype(jnp.bfloat16), a12_ref[...], preferred_element_type=jnp.float32
    )  # (B*N, 2) f32
    f1 = f12[:, 0:1].reshape(B, N, 1)                               # (B, N, 1)
    f2_row = jnp.swapaxes(f12[:, 1:2].reshape(B, N, 1), -1, -2)     # (B, 1, N)
    # TODO(synk): in the production flash-tiled version compute f1/f2 once per
    # q-tile, keep f2 lane-resident, and do not redo the XLU move per kv step.

    # ---- masked softmax over neighbours ------------------------------------
    # LeakyReLU and the adjacency mask fused into one where-chain so only a
    # single (B, N, N) f32 temporary chain stays live.  Large finite negative
    # instead of -inf: identical result whenever a row has >= 1 edge (self
    # loops), no NaN for fully isolated nodes.
    e = f1 + f2_row                                                 # (B, N, N)
    neg = jnp.float32(-1e30)
    e = jnp.where(adj_ref[...] > 0, jnp.where(e > 0, e, alpha * e), neg)
    m = jnp.max(e, axis=-1, keepdims=True)
    p = jnp.exp(e - m)
    inv_denom = pl.reciprocal(jnp.sum(p, axis=-1, keepdims=True), approx=True)
    att = (p * inv_denom).astype(jnp.bfloat16)                      # (B, N, N) bf16

    # TODO(synk): F.dropout on the attention matrix is skipped (inference /
    # dropout=0.0 semantics); training-mode dropout would use pltpu.prng_*.

    # ---- h' = attention @ h -------------------------------------------------
    # TODO(synk): at N=8 the per-graph MXU pass is row-underfilled; a VPU
    # broadcast-multiply-sum (or fatter q-tiles at production N) would recover
    # throughput — kept on the MXU here for simplicity at demo shapes.
    h3 = h.reshape(B, N, f_pad)
    out = jnp.einsum(
        "bij,bjo->bio",
        att,
        h3.astype(jnp.bfloat16),
        preferred_element_type=jnp.float32,
    )  # (B, N, F_pad) f32
    # Lane-dense (multiple of 128) 2-D output slab -> unmasked stores.
    out_ref[...] = out.reshape(B * N, f_pad).astype(out_ref.dtype)


def graph_attention_layer(xx, adj_hat, params, *, alpha):
    """Pallas GAT forward.

    xx:      [B, N, F_in]  float32
    adj_hat: [B, N, N]     float32 (only used as a `> 0` mask, passed as-is)
    params:  output of prepare_gat_params(weight, weight_a1, weight_a2)
    returns: [B, N, F_out] float32
    """
    B, N, F_in = xx.shape
    f_out, f_pad = params["f_out"], params["f_pad"]

    # Flatten (batch, node) so the first matmul is one tall MXU pass and the
    # output is a lane-dense 2-D slab.
    x2 = xx.reshape(B * N, F_in)

    kernel = functools.partial(_gat_kernel, alpha=alpha, batch=B, nodes=N)

    out2 = pl.pallas_call(
        kernel,
        out_shape=jax.ShapeDtypeStruct((B * N, f_pad), jnp.float32),
        # Whole batch in one grid step: amortizes per-step pipeline overhead at
        # these tiny shapes.  (Production: flash-style grid over
        # (batch "parallel", q-tile "parallel", kv-tile "arbitrary") with VMEM
        # accumulators, and vmem_limit_bytes raised on v6e/v5e.)
        grid=(1,),
        in_specs=[
            pl.BlockSpec((B * N, F_in), lambda i: (0, 0)),
            pl.BlockSpec((B, N, N), lambda i: (0, 0, 0)),
            pl.BlockSpec((F_in, f_pad), lambda i: (0, 0)),
            pl.BlockSpec((f_pad, 2), lambda i: (0, 0)),
        ],
        out_specs=pl.BlockSpec((B * N, f_pad), lambda i: (0, 0)),
        compiler_params=pltpu.CompilerParams(
            dimension_semantics=("parallel",),
        ),
    )(x2, adj_hat, params["w_bf16"], params["a12_bf16"])

    # Slice away the lane padding (no-op when F_out is already a multiple of
    # 128 / heads are fused) and restore the 3-D layout wrapper-side.
    return out2[:, :f_out].reshape(B, N, f_out)


def _reference(xx, adj_hat, weight, a1, a2, alpha):
    h = jnp.einsum("bnf,fo->bno", xx, weight)
    f1 = jnp.einsum("bno,ok->bnk", h, a1)               # (B, N, 1)
    f2 = jnp.einsum("bno,ok->bnk", h, a2)               # (B, N, 1)
    e = f1 + jnp.swapaxes(f2, -2, -1)                   # (B, N, N)
    e = jnp.where(e > 0, e, alpha * e)
    att = jnp.where(adj_hat > 0, e, -jnp.inf)
    att = jax.nn.softmax(att, axis=-1)
    return jnp.einsum("bnm,bmo->bno", att, h)


if __name__ == "__main__":
    # Small shapes: batch=2, nodes=8, in_features=16, out_features=32.
    B, N, F_IN, F_OUT = 2, 8, 16, 32
    ALPHA = 0.2          # negative slope of the LeakyReLU
    DROPOUT = 0.0        # dropout rate (identity in this synthetic setup)

    key = jax.random.PRNGKey(0)
    k_x, k_adj, k_w, k_a1, k_a2 = jax.random.split(key, 5)

    xx = jax.random.normal(k_x, (B, N, F_IN), dtype=jnp.float32)

    # Preprocessed adjacency: random 0/1 edges plus self-loops so every row of
    # the masked attention has at least one finite entry (as in real GAT use).
    adj = (jax.random.uniform(k_adj, (B, N, N)) > 0.5).astype(jnp.float32)
    adj = jnp.maximum(adj, jnp.eye(N, dtype=jnp.float32)[None, :, :])

    # Deterministic parameter init (xavier-uniform-ish).
    weight = jax.random.uniform(
        k_w, (F_IN, F_OUT), minval=-0.25, maxval=0.25, dtype=jnp.float32
    )
    weight_a1 = jax.random.uniform(
        k_a1, (F_OUT, 1), minval=-0.25, maxval=0.25, dtype=jnp.float32
    )
    weight_a2 = jax.random.uniform(
        k_a2, (F_OUT, 1), minval=-0.25, maxval=0.25, dtype=jnp.float32
    )

    # One-time parameter prep (bf16 cast + a1/a2 fusion + lane padding).
    params = prepare_gat_params(weight, weight_a1, weight_a2)

    out = graph_attention_layer(xx, adj, params, alpha=ALPHA)
    out = jax.block_until_ready(out)

    ref = _reference(xx, adj, weight, weight_a1, weight_a2, ALPHA)
    assert out.shape == (B, N, F_OUT)
    # Tolerance reflects bf16 MXU operands (f32 accumulation), bf16 attention
    # probabilities and the approx reciprocal in the softmax.
    assert jnp.allclose(out, ref, atol=3e-2, rtol=3e-2), "mismatch vs reference"

    print("KERNEL_OK")
</pallas_src>

<mosaic_0001>
module attributes {stable_mosaic.version = 11 : i64} {
  func.func @_gat_kernel(%arg0: i32, %arg1: memref<16x16xf32, #tpu.memory_space<vmem>>, %arg2: memref<2x8x8xf32, #tpu.memory_space<vmem>>, %arg3: memref<16x128xbf16, #tpu.memory_space<vmem>>, %arg4: memref<128x2xbf16, #tpu.memory_space<vmem>>, %arg5: memref<16x128xf32, #tpu.memory_space<vmem>>) attributes {dimension_semantics = [#tpu.dimension_semantics<parallel>], iteration_bounds = array<i64: 1>, scalar_prefetch = 0 : i64, scratch_operands = 0 : i64, tpu.core_type = #tpu.core_type<tc>, window_params = [{pipeline_mode = #tpu.pipeline_mode<synchronous>, transform_indices = @transform_0, window_bounds = array<i64: 16, 16>}, {pipeline_mode = #tpu.pipeline_mode<synchronous>, transform_indices = @transform_1, window_bounds = array<i64: 2, 8, 8>}, {pipeline_mode = #tpu.pipeline_mode<synchronous>, transform_indices = @transform_2, window_bounds = array<i64: 16, 128>}, {pipeline_mode = #tpu.pipeline_mode<synchronous>, transform_indices = @transform_3, window_bounds = array<i64: 128, 2>}, {pipeline_mode = #tpu.pipeline_mode<synchronous>, transform_indices = @transform_4, window_bounds = array<i64: 16, 128>}]} {
    %c0 = arith.constant 0 : index
    %c0_0 = arith.constant 0 : index
    %0 = vector.load %arg1[%c0, %c0_0] : memref<16x16xf32, #tpu.memory_space<vmem>>, vector<16x16xf32>
    %1 = arith.truncf %0 : vector<16x16xf32> to vector<16x16xbf16>
    %c0_1 = arith.constant 0 : index
    %c0_2 = arith.constant 0 : index
    %2 = vector.load %arg3[%c0_1, %c0_2] : memref<16x128xbf16, #tpu.memory_space<vmem>>, vector<16x128xbf16>
    %cst = arith.constant dense<0.000000e+00> : vector<16x128xf32>
    %3 = tpu.matmul %1, %2, %cst {dimension_numbers = #tpu.dot_dimension_numbers<[1], [0], [0], [1], [0, 0, 1, 1], [], []>} : vector<16x16xbf16>, vector<16x128xbf16>, vector<16x128xf32> -> vector<16x128xf32>
    %4 = arith.truncf %3 : vector<16x128xf32> to vector<16x128xbf16>
    %c0_3 = arith.constant 0 : index
    %c0_4 = arith.constant 0 : index
    %5 = vector.load %arg4[%c0_3, %c0_4] : memref<128x2xbf16, #tpu.memory_space<vmem>>, vector<128x2xbf16>
    %cst_5 = arith.constant dense<0.000000e+00> : vector<16x2xf32>
    %6 = tpu.matmul %4, %5, %cst_5 {dimension_numbers = #tpu.dot_dimension_numbers<[1], [0], [0], [1], [0, 0, 1, 1], [], []>} : vector<16x128xbf16>, vector<128x2xbf16>, vector<16x2xf32> -> vector<16x2xf32>
    %7 = vector.extract_strided_slice %6 {offsets = [0, 0], sizes = [16, 1], strides = [1, 1]} : vector<16x2xf32> to vector<16x1xf32>
    %8 = vector.shape_cast %7 : vector<16x1xf32> to vector<2x8x1xf32>
    %9 = vector.extract_strided_slice %6 {offsets = [0, 1], sizes = [16, 1], strides = [1, 1]} : vector<16x2xf32> to vector<16x1xf32>
    %10 = vector.shape_cast %9 : vector<16x1xf32> to vector<2x8x1xf32>
    %11 = tpu.transpose %10, [0, 2, 1] : vector<2x8x1xf32> -> vector<2x1x8xf32>
    %12 = vector.broadcast %8 : vector<2x8x1xf32> to vector<2x8x8xf32>
    %13 = vector.broadcast %11 : vector<2x1x8xf32> to vector<2x8x8xf32>
    %14 = arith.addf %12, %13 : vector<2x8x8xf32>
    %c0_6 = arith.constant 0 : index
    %c0_7 = arith.constant 0 : index
    %c0_8 = arith.constant 0 : index
    %15 = vector.load %arg2[%c0_6, %c0_7, %c0_8] : memref<2x8x8xf32, #tpu.memory_space<vmem>>, vector<2x8x8xf32>
    %cst_9 = arith.constant 0.000000e+00 : f32
    %16 = vector.broadcast %cst_9 : f32 to vector<2x8x8xf32>
    %17 = arith.cmpf ogt, %15, %16 : vector<2x8x8xf32>
    %cst_10 = arith.constant 0.000000e+00 : f32
    %18 = vector.broadcast %cst_10 : f32 to vector<2x8x8xf32>
    %19 = arith.cmpf ogt, %14, %18 : vector<2x8x8xf32>
    %cst_11 = arith.constant 2.000000e-01 : f32
    %20 = vector.broadcast %cst_11 : f32 to vector<2x8x8xf32>
    %21 = arith.mulf %20, %14 : vector<2x8x8xf32>
    %22 = arith.select %19, %14, %21 : vector<2x8x8xi1>, vector<2x8x8xf32>
    %cst_12 = arith.constant -1.000000e+30 : f32
    %23 = vector.broadcast %cst_12 : f32 to vector<2x8x8xf32>
    %24 = arith.select %17, %22, %23 : vector<2x8x8xi1>, vector<2x8x8xf32>
    %cst_13 = arith.constant dense<0xFF800000> : vector<2x8xf32>
    %25 = vector.multi_reduction <maximumf>, %24, %cst_13 [2] : vector<2x8x8xf32> to vector<2x8xf32>
    %26 = vector.shape_cast %25 : vector<2x8xf32> to vector<2x8x1xf32>
    %27 = vector.broadcast %26 : vector<2x8x1xf32> to vector<2x8x8xf32>
    %28 = arith.subf %24, %27 : vector<2x8x8xf32>
    %29 = math.exp %28 : vector<2x8x8xf32>
    %cst_14 = arith.constant dense<0.000000e+00> : vector<2x8xf32>
    %30 = vector.multi_reduction <add>, %29, %cst_14 [2] : vector<2x8x8xf32> to vector<2x8xf32>
    %31 = vector.shape_cast %30 : vector<2x8xf32> to vector<2x8x1xf32>
    %32 = tpu.reciprocal %31 {approx = true} : vector<2x8x1xf32> -> vector<2x8x1xf32>
    %33 = vector.broadcast %32 : vector<2x8x1xf32> to vector<2x8x8xf32>
    %34 = arith.mulf %29, %33 : vector<2x8x8xf32>
    %35 = arith.truncf %34 : vector<2x8x8xf32> to vector<2x8x8xbf16>
    %36 = vector.shape_cast %3 : vector<16x128xf32> to vector<2x8x128xf32>
    %37 = arith.truncf %36 : vector<2x8x128xf32> to vector<2x8x128xbf16>
    "tpu.trace_start"() <{level = 10 : i32, message = "bij,bjo->bio"}> : () -> ()
    %cst_15 = arith.constant dense<0.000000e+00> : vector<2x8x128xf32>
    %38 = tpu.matmul %35, %37, %cst_15 {dimension_numbers = #tpu.dot_dimension_numbers<[2], [1], [1], [2], [0, 0, 0, 1, 1, 2], [0], [0]>} : vector<2x8x8xbf16>, vector<2x8x128xbf16>, vector<2x8x128xf32> -> vector<2x8x128xf32>
    "tpu.trace_stop"() : () -> ()
    %39 = vector.shape_cast %38 : vector<2x8x128xf32> to vector<16x128xf32>
    %c0_16 = arith.constant 0 : index
    %c0_17 = arith.constant 0 : index
    %40 = vector.load %arg5[%c0_16, %c0_17] : memref<16x128xf32, #tpu.memory_space<vmem>>, vector<16x128xf32>
    tpu.vector_store %arg5[%c0_16, %c0_17], %39 {strides = array<i32>} : memref<16x128xf32, #tpu.memory_space<vmem>>, vector<16x128xf32>,
    return
  }
  func.func @transform_0(%arg0: i32) -> (i32, i32) {
    %c0_i32 = arith.constant 0 : i32
    %c0_i32_0 = arith.constant 0 : i32
    %c0_i32_1 = arith.constant 0 : i32
    return %c0_i32, %c0_i32_0 : i32, i32
  }
  func.func @transform_1(%arg0: i32) -> (i32, i32, i32) {
    %c0_i32 = arith.constant 0 : i32
    %c0_i32_0 = arith.constant 0 : i32
    %c0_i32_1 = arith.constant 0 : i32
    %c0_i32_2 = arith.constant 0 : i32
    return %c0_i32, %c0_i32_0, %c0_i32_1 : i32, i32, i32
  }
  func.func @transform_2(%arg0: i32) -> (i32, i32) {
    %c0_i32 = arith.constant 0 : i32
    %c0_i32_0 = arith.constant 0 : i32
    %c0_i32_1 = arith.constant 0 : i32
    return %c0_i32, %c0_i32_0 : i32, i32
  }
  func.func @transform_3(%arg0: i32) -> (i32, i32) {
    %c0_i32 = arith.constant 0 : i32
    %c0_i32_0 = arith.constant 0 : i32
    %c0_i32_1 = arith.constant 0 : i32
    return %c0_i32, %c0_i32_0 : i32, i32
  }
  func.func @transform_4(%arg0: i32) -> (i32, i32) {
    %c0_i32 = arith.constant 0 : i32
    %c0_i32_0 = arith.constant 0 : i32
    %c0_i32_1 = arith.constant 0 : i32
    return %c0_i32, %c0_i32_0 : i32, i32
  }
}

</mosaic_0001>

<llo_original>
// kernel: tpu_custom_call.1
$region0: #{tpu_custom_call.1}
  #allocation0 [shape = 'u32[]', space=smem, size = 0x4, offset = 0x4, fixed_abs, tag = 'smem constant byte address 0x4 - core index']
  #allocation1 [shape = 'u32[144,128]{1,0:T(1,128)}', space=vmem, size = 0x12000, scoped, tag = 'internal scratch']
  %s0 = inlined_call_operand.vmem [shape: f32[16,16], index: 0, kind: input, shape index: {}]
  %s1 = inlined_call_operand.vmem [shape: f32[2,8,8], index: 1, kind: input, shape index: {}]
  %s2 = inlined_call_operand.vmem [shape: bf16[16,128], index: 2, kind: input, shape index: {}]
  %s3 = inlined_call_operand.vmem [shape: bf16[128,2], index: 3, kind: input, shape index: {}]
  %s4 = inlined_call_operand.hbm [shape: f32[16,128], index: 4, kind: output, shape index: {}]
  %s5 = sld [smem:[#allocation0]]
  $region26: #{tpu_custom_call.1} parent=0
    _
  %s7 = ssub.s32 1, %s5
  %s8 = scalar_select 0, %s7, %s5
  $region1: #{tpu_custom_call.1} parent=0
    #allocation2 [shape = 'u8[8192]{0}', space=vmem, size = 0x2000, scoped, tag = 'output window, operand 0, single buffered']
    #allocation3 [shape = 's32[1]{0}', space=sflag, size = 0x4, scoped, tag = 'scoped memory for tpu_custom_call.1']
    %9 = vsyncpa [#allocation3], 0
    // Predicated region
    $region2: #{tpu_custom_call.1} parent=1 // pred_check
      _
    $region3: #{tpu_custom_call.1} parent=1 // pred_check_branch
      %11 = sbr.rel (0) target = $region5
    $region4: #{tpu_custom_call.1} parent=1 // pred_region
      _
    $region5: #{tpu_custom_call.1} parent=1 // pred_fallthru
      _
    // Predicated region
    $region6: #{tpu_custom_call.1} parent=1 // pred_check
      _
    $region7: #{tpu_custom_call.1} parent=1 // pred_check_branch
      %13 = sbr.rel (0) target = $region9
    $region8: #{tpu_custom_call.1} parent=1 // pred_region
      _
    $region9: #{tpu_custom_call.1} parent=1 // pred_fallthru
      _
    // Predicated region
    $region10: #{tpu_custom_call.1} parent=1 // pred_check
      _
    $region11: #{tpu_custom_call.1} parent=1 // pred_check_branch
      %15 = sbr.rel (0) target = $region13
    $region12: #{tpu_custom_call.1} parent=1 // pred_region
      _
    $region13: #{tpu_custom_call.1} parent=1 // pred_fallthru
      _
    // Predicated region
    $region14: #{tpu_custom_call.1} parent=1 // pred_check
      _
    $region15: #{tpu_custom_call.1} parent=1 // pred_check_branch
      %17 = sbr.rel (0) target = $region17
    $region16: #{tpu_custom_call.1} parent=1 // pred_region
      _
    $region17: #{tpu_custom_call.1} parent=1 // pred_fallthru
      _
    %v19 = vld [vmem:[%s0] sm:$0xff]
    %v20 = vld [vmem:[%s0 + $0x8] sm:$0xff]
    %v21 = vpack.c.bf16 %v20, %v19
    %v22 = vld [vmem:[%s2] sm:$0xf]
    %v23 = vld [vmem:[%s2 + $0x4] sm:$0xf]
    %v26 = vunpack.c.l.b16 %v22
    %v27 = vunpack.c.l.b16 %v23
    %v28 = vpack.c.b16 %v27, %v26
    %vm30 = vcmask 130048
    %v32 = vsel %vm30, %v21, 0
    %34 = vmatprep.subr.bf16.mxu0 0
    %35 = vmatpush1.bf16.msra.mxu0 0
    %36 = vmatprep.subr.bf16.mxu0 0
    %37 = vmatpush1.bf16.msra.mxu0 0
    %38 = vmatprep.subr.bf16.mxu0 0
    %39 = vmatpush1.bf16.msra.mxu0 0
    %40 = vmatprep.subr.bf16.mxu0 0
    %41 = vmatpush1.bf16.msra.mxu0 0
    %42 = vmatprep.subr.bf16.mxu0 0
    %43 = vmatpush1.bf16.msra.mxu0 0
    %44 = vmatprep.subr.bf16.mxu0 0
    %45 = vmatpush1.bf16.msra.mxu0 0
    %46 = vmatprep.subr.bf16.mxu0 0
    %47 = vmatpush1.bf16.msra.mxu0 0
    %48 = vmatprep.subr.bf16.mxu0 0
    %49 = vmatpush1.bf16.msra.mxu0 %v28
    %50 = vmatprep.subr.bf16.mxu0 0
    %51 = vmatpush2.bf16.msra.mxu0 0
    %52 = vmatprep.subr.bf16.mxu0 0
    %53 = vmatpush2.bf16.msra.mxu0 0
    %54 = vmatprep.subr.bf16.mxu0 0
    %55 = vmatpush2.bf16.msra.mxu0 0
    %56 = vmatprep.subr.bf16.mxu0 0
    %57 = vmatpush2.bf16.msra.mxu0 0
    %58 = vmatprep.subr.bf16.mxu0 0
    %59 = vmatpush2.bf16.msra.mxu0 0
    %60 = vmatprep.subr.bf16.mxu0 0
    %61 = vmatpush2.bf16.msra.mxu0 0
    %62 = vmatprep.subr.bf16.mxu0 0
    %63 = vmatpush2.bf16.msra.mxu0 0
    %64 = vmatprep.subr.bf16.mxu0 0
    %65 = vmatpush2.bf16.msra.mxu0 0
    %66 = vmatprep.mubr.bf16.mxu0 0
    %67 = vmatmul.mubr.bf16.gmra.mxu0 %v32
    %v68 = vpop.f32.mrf.mxu0
    %v69 = vadd.f32 0.0, %v68
    %v70 = vpop.f32.mrf.mxu0
    %v71 = vpop.f32.mrf.mxu0
    %v72 = vadd.f32 0.0, %v71
    %v73 = vpop.f32.mrf.mxu0
    %74 = vdwg.mxu0
    %v75 = vpack.c.bf16 %v72, %v69
    %v76 = vld [vmem:[%s3] sm:$0xf]
    %v77 = vld [vmem:[%s3 + $0x4] sm:$0xf]
    %v78 = vld [vmem:[%s3 + $0x8] sm:$0xf]
    %v79 = vld [vmem:[%s3 + $0xc] sm:$0xf]
    %v80 = vld [vmem:[%s3 + $0x10] sm:$0xf]
    %v81 = vld [vmem:[%s3 + $0x14] sm:$0xf]
    %v82 = vld [vmem:[%s3 + $0x18] sm:$0xf]
    %v83 = vld [vmem:[%s3 + $0x1c] sm:$0xf]
    %v84 = vld [vmem:[%s3 + $0x20] sm:$0xf]
    %v85 = vld [vmem:[%s3 + $0x24] sm:$0xf]
    %v86 = vld [vmem:[%s3 + $0x28] sm:$0xf]
    %v87 = vld [vmem:[%s3 + $0x2c] sm:$0xf]
    %v88 = vld [vmem:[%s3 + $0x30] sm:$0xf]
    %v89 = vld [vmem:[%s3 + $0x34] sm:$0xf]
    %v90 = vld [vmem:[%s3 + $0x38] sm:$0xf]
    %v91 = vld [vmem:[%s3 + $0x3c] sm:$0xf]
    %v108 = vunpack.c.l.b16 %v76
    %v109 = vunpack.c.l.b16 %v77
    %v110 = vunpack.c.l.b16 %v78
    %v111 = vunpack.c.l.b16 %v79
    %v112 = vunpack.c.l.b16 %v80
    %v113 = vunpack.c.l.b16 %v81
    %v114 = vunpack.c.l.b16 %v82
    %v115 = vunpack.c.l.b16 %v83
    %v116 = vunpack.c.l.b16 %v84
    %v117 = vunpack.c.l.b16 %v85
    %v118 = vunpack.c.l.b16 %v86
    %v119 = vunpack.c.l.b16 %v87
    %v120 = vunpack.c.l.b16 %v88
    %v121 = vunpack.c.l.b16 %v89
    %v122 = vunpack.c.l.b16 %v90
    %v123 = vunpack.c.l.b16 %v91
    %v124 = vpack.c.b16 %v109, %v108
    %v125 = vpack.c.b16 %v111, %v110
    %v126 = vpack.c.b16 %v113, %v112
    %v127 = vpack.c.b16 %v115, %v114
    %v128 = vpack.c.b16 %v117, %v116
    %v129 = vpack.c.b16 %v119, %v118
    %v130 = vpack.c.b16 %v121, %v120
    %v131 = vpack.c.b16 %v123, %v122
    %140 = vmatprep.subr.bf16.mxu0 0
    %141 = vmatpush1.bf16.msra.mxu0 %v131
    %142 = vmatprep.subr.bf16.mxu0 0
    %143 = vmatpush1.bf16.msra.mxu0 %v130
    %144 = vmatprep.subr.bf16.mxu0 0
    %145 = vmatpush1.bf16.msra.mxu0 %v129
    %146 = vmatprep.subr.bf16.mxu0 0
    %147 = vmatpush1.bf16.msra.mxu0 %v128
    %148 = vmatprep.subr.bf16.mxu0 0
    %149 = vmatpush1.bf16.msra.mxu0 %v127
    %150 = vmatprep.subr.bf16.mxu0 0
    %151 = vmatpush1.bf16.msra.mxu0 %v126
    %152 = vmatprep.subr.bf16.mxu0 0
    %153 = vmatpush1.bf16.msra.mxu0 %v125
    %154 = vmatprep.subr.bf16.mxu0 0
    %155 = vmatpush1.bf16.msra.mxu0 %v124
    %156 = vmatprep.subr.bf16.mxu0 0
    %157 = vmatpush2.bf16.msra.mxu0 0
    %158 = vmatprep.subr.bf16.mxu0 0
    %159 = vmatpush2.bf16.msra.mxu0 0
    %160 = vmatprep.subr.bf16.mxu0 0
    %161 = vmatpush2.bf16.msra.mxu0 0
    %162 = vmatprep.subr.bf16.mxu0 0
    %163 = vmatpush2.bf16.msra.mxu0 0
    %164 = vmatprep.subr.bf16.mxu0 0
    %165 = vmatpush2.bf16.msra.mxu0 0
    %166 = vmatprep.subr.bf16.mxu0 0
    %167 = vmatpush2.bf16.msra.mxu0 0
    %168 = vmatprep.subr.bf16.mxu0 0
    %169 = vmatpush2.bf16.msra.mxu0 0
    %170 = vmatprep.subr.bf16.mxu0 0
    %171 = vmatpush2.bf16.msra.mxu0 0
    %172 = vmatprep.mubr.bf16.mxu0 0
    %173 = vmatmul.mubr.bf16.gmra.mxu0 %v75
    %v174 = vpop.f32.mrf.mxu0
    %v175 = vadd.f32 0.0, %v174
    %v176 = vpop.f32.mrf.mxu0
    %v177 = vpop.f32.mrf.mxu0
    %v178 = vadd.f32 0.0, %v177
    %v179 = vpop.f32.mrf.mxu0
    %180 = vdwg.mxu0
    %183 = vrot.lane.b32.xlu0 %v175, 127
    %v184 = vpop.permute.xlu0 %183
    %185 = vrot.lane.b32.xlu0 %v178, 127
    %v186 = vpop.permute.xlu0 %185
    %189 = vxpose.xlu0.b32.start [1/16] %v184, 128
    %190 = vxpose.xlu0.b32.cont [2/16] 0.0, 128
    %191 = vxpose.xlu0.b32.cont [3/16] 0.0, 128
    %192 = vxpose.xlu0.b32.cont [4/16] 0.0, 128
    %193 = vxpose.xlu0.b32.cont [5/16] 0.0, 128
    %194 = vxpose.xlu0.b32.cont [6/16] 0.0, 128
    %195 = vxpose.xlu0.b32.cont [7/16] 0.0, 128
    %196 = vxpose.xlu0.b32.cont [8/16] 0.0, 128
    %197 = vxpose.xlu0.b32.cont [9/16] 0.0, 128
    %198 = vxpose.xlu0.b32.cont [10/16] 0.0, 128
    %199 = vxpose.xlu0.b32.cont [11/16] 0.0, 128
    %200 = vxpose.xlu0.b32.cont [12/16] 0.0, 128
    %201 = vxpose.xlu0.b32.cont [13/16] 0.0, 128
    %202 = vxpose.xlu0.b32.cont [14/16] 0.0, 128
    %203 = vxpose.xlu0.b32.cont [15/16] 0.0, 128
    %204 = vxpose.xlu0.b32.end [16/16] 0.0, 128
    %v205 = vpop.trf.xlu0
    %v206 = vpop.trf.xlu0
    %v207 = vpop.trf.xlu0
    %v208 = vpop.trf.xlu0
    %v209 = vpop.trf.xlu0
    %v210 = vpop.trf.xlu0
    %v211 = vpop.trf.xlu0
    %v212 = vpop.trf.xlu0
    %v213 = vpop.trf.xlu0
    %v214 = vpop.trf.xlu0
    %v215 = vpop.trf.xlu0
    %v216 = vpop.trf.xlu0
    %v217 = vpop.trf.xlu0
    %v218 = vpop.trf.xlu0
    %v219 = vpop.trf.xlu0
    %v220 = vpop.trf.xlu0
    %221 = vxpose.xlu0.b32.start [1/16] %v186, 128
    %222 = vxpose.xlu0.b32.cont [2/16] 0.0, 128
    %223 = vxpose.xlu0.b32.cont [3/16] 0.0, 128
    %224 = vxpose.xlu0.b32.cont [4/16] 0.0, 128
    %225 = vxpose.xlu0.b32.cont [5/16] 0.0, 128
    %226 = vxpose.xlu0.b32.cont [6/16] 0.0, 128
    %227 = vxpose.xlu0.b32.cont [7/16] 0.0, 128
    %228 = vxpose.xlu0.b32.cont [8/16] 0.0, 128
    %229 = vxpose.xlu0.b32.cont [9/16] 0.0, 128
    %230 = vxpose.xlu0.b32.cont [10/16] 0.0, 128
    %231 = vxpose.xlu0.b32.cont [11/16] 0.0, 128
    %232 = vxpose.xlu0.b32.cont [12/16] 0.0, 128
    %233 = vxpose.xlu0.b32.cont [13/16] 0.0, 128
    %234 = vxpose.xlu0.b32.cont [14/16] 0.0, 128
    %235 = vxpose.xlu0.b32.cont [15/16] 0.0, 128
    %236 = vxpose.xlu0.b32.end [16/16] 0.0, 128
    %v237 = vpop.trf.xlu0
    %v238 = vpop.trf.xlu0
    %v239 = vpop.trf.xlu0
    %v240 = vpop.trf.xlu0
    %v241 = vpop.trf.xlu0
    %v242 = vpop.trf.xlu0
    %v243 = vpop.trf.xlu0
    %v244 = vpop.trf.xlu0
    %v245 = vpop.trf.xlu0
    %v246 = vpop.trf.xlu0
    %v247 = vpop.trf.xlu0
    %v248 = vpop.trf.xlu0
    %v249 = vpop.trf.xlu0
    %v250 = vpop.trf.xlu0
    %v251 = vpop.trf.xlu0
    %v252 = vpop.trf.xlu0
    %253 = vset.pattern.permute.xlu0 0
    %254 = vperm.xlu0 %253, %v175
    %v255 = vpop.permute.xlu0 %254
    %257 = vset.pattern.permute.xlu0 0
    %258 = vperm.xlu0 %257, %v178
    %v259 = vpop.permute.xlu0 %258
    %v261 = vlaneseq
    %v262 = vshrl.u32 %v261, 7
    %v263 = vsub.s32 0, %v262
    %v264 = vrot.slane %v205, %v263
    %v265 = vlaneseq
    %v266 = vshrl.u32 %v265, 7
    %v267 = vsub.s32 0, %v266
    %v268 = vrot.slane %v237, %v267
    %v269 = vadd.f32 %v255, %v264
    %v270 = vadd.f32 %v259, %v268
    %v271 = vld [vmem:[%s1] sm:$0xff]
    %v272 = vld [vmem:[%s1 + $0x8] sm:$0xff]
    %vm273 = vcmp.gt.f32.partialorder %v271, 0.0
    %vm274 = vcmp.gt.f32.partialorder %v272, 0.0
    %vm275 = vcmp.gt.f32.partialorder %v269, 0.0
    %vm276 = vcmp.gt.f32.partialorder %v270, 0.0
    %v277 = vmul.f32 %v269, 0.2
    %v278 = vmul.f32 %v270, 0.2
    %v279 = vsel %vm275, %v269, %v277
    %v280 = vsel %vm276, %v270, %v278
    %v281 = vsel %vm273, %v279, -1e+30
    %v282 = vsel %vm274, %v280, -1e+30
    %vm283 = vcmask 64512
    %v284 = vsel %vm283, %v281, -inf
    %285 = vmax.xlane.f32.xlu0 %v284
    %v286 = vpop.xlane.xlu0 %285
    %v287 = vsel %vm283, %v282, -inf
    %288 = vmax.xlane.f32.xlu0 %v287
    %v289 = vpop.xlane.xlu0 %288
    %v290 = vsub.f32 %v281, %v286
    %v291 = vsub.f32 %v282, %v289
    %v292 = vmul.f32 %v290, 1.442695
    %v293 = vpow.pop %v292
    %v294 = vmul.f32 %v291, 1.442695
    %v295 = vpow.pop %v294
    %v296 = vsel %vm283, %v293, 0.0
    %297 = vadd.xlane.f32.xlu0 %v296
    %v298 = vpop.xlane.xlu0 %297
    %v299 = vsel %vm283, %v295, 0.0
    %300 = vadd.xlane.f32.xlu0 %v299
    %v301 = vpop.xlane.xlu0 %300
    %v302 = vrcp.pop %v298
    %v303 = vrcp.pop %v301
    %v304 = vmul.f32 %v293, %v302
    %v305 = vmul.f32 %v295, %v303
    %v306 = vpack.c.bf16 %v304, %v304
    %v307 = vpack.c.bf16 %v305, %v305
    %v308 = vpack.c.bf16 %v69, %v69
    %v309 = vpack.c.bf16 %v72, %v72
    %v311 = vsel %vm283, %v306, 0
    %vm313 = vcmask 1043456
    %v315 = vsel %vm313, %v308, 0
    %317 = vmatprep.subr.bf16.mxu0 0
    %318 = vmatpush1.bf16.msra.mxu0 0
    %319 = vmatprep.subr.bf16.mxu0 0
    %320 = vmatpush1.bf16.msra.mxu0 0
    %321 = vmatprep.subr.bf16.mxu0 0
    %322 = vmatpush1.bf16.msra.mxu0 0
    %323 = vmatprep.subr.bf16.mxu0 0
    %324 = vmatpush1.bf16.msra.mxu0 0
    %325 = vmatprep.subr.bf16.mxu0 0
    %326 = vmatpush1.bf16.msra.mxu0 0
    %327 = vmatprep.subr.bf16.mxu0 0
    %328 = vmatpush1.bf16.msra.mxu0 0
    %329 = vmatprep.subr.bf16.mxu0 0
    %330 = vmatpush1.bf16.msra.mxu0 0
    %331 = vmatprep.subr.bf16.mxu0 0
    %332 = vmatpush1.bf16.msra.mxu0 %v315
    %333 = vmatprep.subr.bf16.mxu0 0
    %334 = vmatpush2.bf16.msra.mxu0 0
    %335 = vmatprep.subr.bf16.mxu0 0
    %336 = vmatpush2.bf16.msra.mxu0 0
    %337 = vmatprep.subr.bf16.mxu0 0
    %338 = vmatpush2.bf16.msra.mxu0 0
    %339 = vmatprep.subr.bf16.mxu0 0
    %340 = vmatpush2.bf16.msra.mxu0 0
    %341 = vmatprep.subr.bf16.mxu0 0
    %342 = vmatpush2.bf16.msra.mxu0 0
    %343 = vmatprep.subr.bf16.mxu0 0
    %344 = vmatpush2.bf16.msra.mxu0 0
    %345 = vmatprep.subr.bf16.mxu0 0
    %346 = vmatpush2.bf16.msra.mxu0 0
    %347 = vmatprep.subr.bf16.mxu0 0
    %348 = vmatpush2.bf16.msra.mxu0 0
    %349 = vmatprep.mubr.bf16.mxu0 0
    %350 = vmatmul.mubr.bf16.gmra.mxu0 %v311
    %v351 = vpop.f32.mrf.mxu0
    %v352 = vadd.f32 0.0, %v351
    %v353 = vpop.f32.mrf.mxu0
    %v354 = vpop.f32.mrf.mxu0
    %v355 = vpop.f32.mrf.mxu0
    %356 = vdwg.mxu0
    %v358 = vsel %vm283, %v307, 0
    %v361 = vsel %vm313, %v309, 0
    %363 = vmatprep.subr.bf16.mxu0 0
    %364 = vmatpush1.bf16.msra.mxu0 0
    %365 = vmatprep.subr.bf16.mxu0 0
    %366 = vmatpush1.bf16.msra.mxu0 0
    %367 = vmatprep.subr.bf16.mxu0 0
    %368 = vmatpush1.bf16.msra.mxu0 0
    %369 = vmatprep.subr.bf16.mxu0 0
    %370 = vmatpush1.bf16.msra.mxu0 0
    %371 = vmatprep.subr.bf16.mxu0 0
    %372 = vmatpush1.bf16.msra.mxu0 0
    %373 = vmatprep.subr.bf16.mxu0 0
    %374 = vmatpush1.bf16.msra.mxu0 0
    %375 = vmatprep.subr.bf16.mxu0 0
    %376 = vmatpush1.bf16.msra.mxu0 0
    %377 = vmatprep.subr.bf16.mxu0 0
    %378 = vmatpush1.bf16.msra.mxu0 %v361
    %379 = vmatprep.subr.bf16.mxu0 0
    %380 = vmatpush2.bf16.msra.mxu0 0
    %381 = vmatprep.subr.bf16.mxu0 0
    %382 = vmatpush2.bf16.msra.mxu0 0
    %383 = vmatprep.subr.bf16.mxu0 0
    %384 = vmatpush2.bf16.msra.mxu0 0
    %385 = vmatprep.subr.bf16.mxu0 0
    %386 = vmatpush2.bf16.msra.mxu0 0
    %387 = vmatprep.subr.bf16.mxu0 0
    %388 = vmatpush2.bf16.msra.mxu0 0
    %389 = vmatprep.subr.bf16.mxu0 0
    %390 = vmatpush2.bf16.msra.mxu0 0
    %391 = vmatprep.subr.bf16.mxu0 0
    %392 = vmatpush2.bf16.msra.mxu0 0
    %393 = vmatprep.subr.bf16.mxu0 0
    %394 = vmatpush2.bf16.msra.mxu0 0
    %395 = vmatprep.mubr.bf16.mxu0 0
    %396 = vmatmul.mubr.bf16.gmra.mxu0 %v358
    %v397 = vpop.f32.mrf.mxu0
    %v398 = vadd.f32 0.0, %v397
    %v399 = vpop.f32.mrf.mxu0
    %v400 = vpop.f32.mrf.mxu0
    %v401 = vpop.f32.mrf.mxu0
    %402 = vdwg.mxu0
    %403 = vst [vmem:[#allocation2] sm:$0xff] %v352
    %404 = vst [vmem:[#allocation2 + $0x8] sm:$0xff] %v398
    // Predicated region
    $region18: #{tpu_custom_call.1} parent=1 // pred_check
      _
    $region19: #{tpu_custom_call.1} parent=1 // pred_check_branch
      %406 = sbr.rel (0) target = $region21
    $region20: #{tpu_custom_call.1} parent=1 // pred_region
      %s408 = ssub.s32 256, 256
      %409 = vsyncadd [#allocation3], %s408
      %s410 = sshll.u32 [#allocation2], 4
      %s411 = int_to_ptr.vmem [resolvable:$true] %s410
      %416 = dma.vmem_to_hbm [thread:$0]  %s411, 256, %s4, [#allocation3], 128, 128, 8
    $region21: #{tpu_custom_call.1} parent=1 // pred_fallthru
      _
    // Predicated region
    $region22: #{tpu_custom_call.1} parent=1 // pred_check
      _
    $region23: #{tpu_custom_call.1} parent=1 // pred_check_branch
      %418 = sbr.rel (0) target = $region25
    $region24: #{tpu_custom_call.1} parent=1 // pred_region
      %419 = dma.done [#allocation3], 256
    $region25: #{tpu_custom_call.1} parent=1 // pred_fallthru
      _
    %420 = vsyncpa [#allocation3], 1

</llo_original>
